<compile_context>
chip_gen: v6e
topology: v6e:2x2x1
jax: 0.10.0
libtpu: 0.0.40
codegen_flags: <defaults>
</compile_context>

<pallas_src>
import numpy as np
import jax
import jax.numpy as jnp
from jax.experimental import pallas as pl
from jax.experimental.pallas import tpu as pltpu

# ----------------------------- configuration -------------------------------
FEAT_HW = 8            # backbone feature map spatial size (HxW)
FEAT_C = 128           # backbone feature channels
STDN_IN = [48, 64, 80, 96, 112, 128]                                # channel stops
STDN_OUT = [(1, 48), (2, 64), (4, 80), (8, 96), (16, 28), (32, 8)]  # (hw, C) per scale
K_ANCHORS = 3
CLASS_COUNT = 5
N_CLS = K_ANCHORS * CLASS_COUNT      # 15
N_LOC = K_ANCHORS * 4                # 12
N_HEAD = N_CLS + N_LOC               # 27  (fused cls|loc per scale)


def _scale_ratio(out_hw):
    return out_hw // FEAT_HW if out_hw > FEAT_HW else 1


# fused head-weight column layout (pixel-shuffle scales block-expanded)
_COL_W = [(_scale_ratio(hw) ** 2) * N_HEAD for hw, _ in STDN_OUT]    # [27,27,27,27,108,432]
_COL_OFF = [int(v) for v in np.cumsum([0] + _COL_W)]                 # [0,27,54,81,108,216,648]
N_TOT = _COL_OFF[-1]                                                 # 648
N_TOT_PAD = ((N_TOT + 127) // 128) * 128                             # 768 (lane-dense output)

# scale-transfer avg-pool scales (out_hw < 8) and their row/col extents
_POOL_SCALES = [i for i, (hw, _) in enumerate(STDN_OUT) if hw < FEAT_HW]
_POOL_ROWS = [STDN_OUT[i][0] * STDN_OUT[i][0] for i in _POOL_SCALES]
_POOL_OFF = [int(v) for v in np.cumsum([0] + _POOL_ROWS)]            # [0,1,5,21]
NP_ROWS = _POOL_OFF[-1]                                              # 21
POOL_COLS = _COL_OFF[len(_POOL_SCALES)]                              # 81 live columns


# ------------------------------ Pallas kernel -------------------------------
def _stdn_fused_kernel(xp_ref, ws_ref, bs_ref, wall_ref, ball_ref, g_ref):
    # stem 1x1-conv + ReLU : (rows_blk, c_in) @ (c_in, 128), f32 accumulate
    f = jnp.dot(xp_ref[...], ws_ref[...], preferred_element_type=jnp.float32)
    f = jnp.maximum(f + bs_ref[...], 0.0).astype(jnp.bfloat16)       # (rows_blk, 128)

    # all six scale heads (cls|loc fused, K zero-padded to 128, pre-shuffle
    # block weights for the pixel-shuffle scales) in ONE lane-dense matmul.
    t = jnp.dot(f, wall_ref[...], preferred_element_type=jnp.float32) + ball_ref[...]
    g_ref[...] = t.astype(g_ref.dtype)                               # bf16 writeback


def stdn_fused(xp_flat, stem_w, stem_b, w_all, b_all):
    rows, c_in = xp_flat.shape
    n_tot = w_all.shape[1]
    # 2-way row split keeps both v7x TensorCores busy; single-TC v5e/v6e pay
    # only one extra ~0.35us grid step.
    n_blocks = 2 if (rows % 16 == 0) else 1
    row_blk = rows // n_blocks

    flops = 2 * rows * (c_in * FEAT_C + FEAT_C * n_tot)
    bytes_accessed = (xp_flat.size * 2 + stem_w.size * 2 + stem_b.size * 4
                      + w_all.size * 2 + b_all.size * 4 + rows * n_tot * 2)

    return pl.pallas_call(
        _stdn_fused_kernel,
        out_shape=jax.ShapeDtypeStruct((rows, n_tot), jnp.bfloat16),
        grid=(n_blocks,),
        in_specs=[
            pl.BlockSpec((row_blk, c_in), lambda i: (i, 0)),
            pl.BlockSpec((c_in, FEAT_C), lambda i: (0, 0)),
            pl.BlockSpec((1, FEAT_C), lambda i: (0, 0)),
            pl.BlockSpec((FEAT_C, n_tot), lambda i: (0, 0)),
            pl.BlockSpec((1, n_tot), lambda i: (0, 0)),
        ],
        out_specs=pl.BlockSpec((row_blk, n_tot), lambda i: (i, 0)),
        compiler_params=pltpu.CompilerParams(
            dimension_semantics=("parallel",)),   # v7x: shard rows over 2 TCs
        cost_estimate=pl.CostEstimate(flops=flops, transcendentals=0,
                                      bytes_accessed=bytes_accessed),
    )(xp_flat, stem_w, stem_b, w_all, b_all)


# ------------------------------ parameter setup -----------------------------
def avg_pool_matrix(in_hw, out_hw):
    """Row-major (out_hw^2, in_hw^2) average-pool matrix (non-overlapping)."""
    k = in_hw // out_hw
    p = np.zeros((out_hw * out_hw, in_hw * in_hw), np.float32)
    for oh in range(out_hw):
        for ow in range(out_hw):
            for ih in range(oh * k, (oh + 1) * k):
                for iw in range(ow * k, (ow + 1) * k):
                    p[oh * out_hw + ow, ih * in_hw + iw] = 1.0 / (k * k)
    return p


def xavier(key, fan_in, fan_out):
    limit = float(np.sqrt(6.0 / (fan_in + fan_out)))
    return jax.random.uniform(key, (fan_in, fan_out), jnp.float32, -limit, limit)


def init_params(key, c_in):
    n_scales = len(STDN_OUT)
    keys = jax.random.split(key, 1 + 2 * n_scales)

    # stem 1x1-conv
    stem_w = np.asarray(xavier(keys[0], c_in, FEAT_C))
    stem_b = np.zeros((1, FEAT_C), np.float32)

    # fused all-scale head weight: K zero-padded to 128, cls|loc concatenated,
    # pixel-shuffle scales block-expanded into the pre-shuffle layout.
    w_all = np.zeros((FEAT_C, N_TOT_PAD), np.float32)
    b_all = np.zeros((1, N_TOT_PAD), np.float32)     # conv bias init is 0
    for i, (stop, (out_hw, out_c)) in enumerate(zip(STDN_IN, STDN_OUT)):
        wc = np.asarray(xavier(keys[1 + 2 * i], out_c, N_CLS))
        wl = np.asarray(xavier(keys[2 + 2 * i], out_c, N_LOC))
        w = np.concatenate([wc, wl], axis=1)                     # (out_c, 27)
        r = _scale_ratio(out_hw)
        if r == 1:
            blk = w                                              # (stop, 27)
        else:
            # blk[c*r*r + s, t*27 + n] = w[c, n] if s == t else 0
            eye = np.eye(r * r, dtype=np.float32)
            blk = np.einsum('cn,st->cstn', w, eye).reshape(out_c * r * r,
                                                           r * r * N_HEAD)
        assert blk.shape[0] == stop
        w_all[:stop, _COL_OFF[i]:_COL_OFF[i] + _COL_W[i]] = blk

    # stacked STM avg-pool matrices for the small scales (used in the wrapper)
    pool = np.zeros((NP_ROWS, FEAT_HW * FEAT_HW), np.float32)
    for j, i in enumerate(_POOL_SCALES):
        out_hw = STDN_OUT[i][0]
        pool[_POOL_OFF[j]:_POOL_OFF[j + 1]] = avg_pool_matrix(FEAT_HW, out_hw)

    return {
        "stem_w": jnp.asarray(stem_w, jnp.bfloat16),
        "stem_b": jnp.asarray(stem_b, jnp.float32),
        "w_all": jnp.asarray(w_all, jnp.bfloat16),
        "b_all": jnp.asarray(b_all, jnp.float32),
        "pool": jnp.asarray(pool, jnp.bfloat16),   # 1/4, 1/16, 1/64 exact in bf16
    }


# ------------------------------ STDN forward --------------------------------
def stdn_forward(x_nchw, params):
    B, c_in, H, W = x_nchw.shape
    x_nhwc = jnp.transpose(x_nchw, (0, 2, 3, 1))

    # stem avg-pool HxW -> 8x8 (pure reduction; kept in XLA)
    k = H // FEAT_HW
    xp = x_nhwc.reshape(B, FEAT_HW, k, FEAT_HW, k, c_in).mean(axis=(2, 4))
    xp = xp.reshape(B * FEAT_HW * FEAT_HW, c_in).astype(jnp.bfloat16)

    # single fused Pallas call: stem conv + ReLU + all six heads
    g = stdn_fused(xp, params["stem_w"], params["stem_b"],
                   params["w_all"], params["b_all"])          # (B*64, 768) bf16
    g = g.reshape(B, FEAT_HW * FEAT_HW, N_TOT_PAD)

    # STM average-pooled scales: p = pool @ g[:, :, :81].  Exact reorder by
    # associativity ((pool@f)@W + b == pool@(f@W + b) because every pool row
    # sums to 1); only the 81 live columns are computed.
    p = jnp.einsum('pk,bkc->bpc', params["pool"], g[:, :, :POOL_COLS],
                   preferred_element_type=jnp.float32).astype(jnp.bfloat16)

    class_preds, loc_preds = [], []
    pj = 0
    for i, (out_hw, out_c) in enumerate(STDN_OUT):
        r = _scale_ratio(out_hw)
        c0, cw = _COL_OFF[i], _COL_W[i]
        if out_hw < FEAT_HW:                    # STM: average pooling
            rows = out_hw * out_hw
            out = p[:, _POOL_OFF[pj]:_POOL_OFF[pj] + rows, c0:c0 + N_HEAD]
            out = out.reshape(B, out_hw, out_hw, N_HEAD)
            pj += 1
        elif out_hw == FEAT_HW:                 # STM: identity
            out = g[:, :, c0:c0 + N_HEAD].reshape(B, FEAT_HW, FEAT_HW, N_HEAD)
        else:                                   # STM: pixel shuffle (glue only)
            blk = g[:, :, c0:c0 + cw].reshape(B, FEAT_HW, FEAT_HW, r, r, N_HEAD)
            out = jnp.transpose(blk, (0, 1, 3, 2, 4, 5)).reshape(
                B, out_hw, out_hw, N_HEAD)

        # permute(0,2,3,1).view(b, -1, class_count) == NHWC flatten + reshape
        class_preds.append(out[..., :N_CLS].reshape(B, -1, CLASS_COUNT))
        loc_preds.append(out[..., N_CLS:].reshape(B, -1, 4))

    # glue runs on bf16; cast final predictions back to f32 once.
    class_preds = jnp.concatenate(class_preds, axis=1).astype(jnp.float32)
    loc_preds = jnp.concatenate(loc_preds, axis=1).astype(jnp.float32)
    return class_preds, loc_preds


# ---------------------------------- main -------------------------------------
if __name__ == "__main__":
    key = jax.random.PRNGKey(0)
    k_param, k_x = jax.random.split(key)

    B, C_IN, H, W = 2, 4, 32, 32
    params = init_params(k_param, C_IN)
    x = jax.random.normal(k_x, (B, C_IN, H, W), jnp.float32)

    fwd = jax.jit(stdn_forward)
    class_preds, loc_preds = fwd(x, params)
    jax.block_until_ready((class_preds, loc_preds))

    total_anchors = K_ANCHORS * sum(hw * hw for hw, _ in STDN_OUT)  # 4095
    assert class_preds.shape == (B, total_anchors, CLASS_COUNT), class_preds.shape
    assert loc_preds.shape == (B, total_anchors, 4), loc_preds.shape
    assert bool(jnp.all(jnp.isfinite(class_preds)))
    assert bool(jnp.all(jnp.isfinite(loc_preds)))

    print("KERNEL_OK")
</pallas_src>

<mosaic_0001>
module attributes {stable_mosaic.version = 11 : i64} {
  func.func @_stdn_fused_kernel(%arg0: i32, %arg1: memref<64x4xbf16, #tpu.memory_space<vmem>>, %arg2: memref<4x128xbf16, #tpu.memory_space<vmem>>, %arg3: memref<1x128xf32, #tpu.memory_space<vmem>>, %arg4: memref<128x768xbf16, #tpu.memory_space<vmem>>, %arg5: memref<1x768xf32, #tpu.memory_space<vmem>>, %arg6: memref<64x768xbf16, #tpu.memory_space<vmem>>) attributes {dimension_semantics = [#tpu.dimension_semantics<parallel>], iteration_bounds = array<i64: 2>, scalar_prefetch = 0 : i64, scratch_operands = 0 : i64, tpu.core_type = #tpu.core_type<tc>, window_params = [{transform_indices = @transform_0, window_bounds = array<i64: 64, 4>}, {pipeline_mode = #tpu.pipeline_mode<synchronous>, transform_indices = @transform_1, window_bounds = array<i64: 4, 128>}, {pipeline_mode = #tpu.pipeline_mode<synchronous>, transform_indices = @transform_2, window_bounds = array<i64: 1, 128>}, {pipeline_mode = #tpu.pipeline_mode<synchronous>, transform_indices = @transform_3, window_bounds = array<i64: 128, 768>}, {pipeline_mode = #tpu.pipeline_mode<synchronous>, transform_indices = @transform_4, window_bounds = array<i64: 1, 768>}, {transform_indices = @transform_5, window_bounds = array<i64: 64, 768>}]} {
    %c0 = arith.constant 0 : index
    %c0_0 = arith.constant 0 : index
    %0 = vector.load %arg1[%c0, %c0_0] : memref<64x4xbf16, #tpu.memory_space<vmem>>, vector<64x4xbf16>
    %c0_1 = arith.constant 0 : index
    %c0_2 = arith.constant 0 : index
    %1 = vector.load %arg2[%c0_1, %c0_2] : memref<4x128xbf16, #tpu.memory_space<vmem>>, vector<4x128xbf16>
    %cst = arith.constant dense<0.000000e+00> : vector<64x128xf32>
    %2 = tpu.matmul %0, %1, %cst {dimension_numbers = #tpu.dot_dimension_numbers<[1], [0], [0], [1], [0, 0, 1, 1], [], []>} : vector<64x4xbf16>, vector<4x128xbf16>, vector<64x128xf32> -> vector<64x128xf32>
    %c0_3 = arith.constant 0 : index
    %c0_4 = arith.constant 0 : index
    %3 = vector.load %arg3[%c0_3, %c0_4] : memref<1x128xf32, #tpu.memory_space<vmem>>, vector<1x128xf32>
    %4 = vector.broadcast %3 : vector<1x128xf32> to vector<64x128xf32>
    %5 = arith.addf %2, %4 : vector<64x128xf32>
    %cst_5 = arith.constant 0.000000e+00 : f32
    %6 = vector.broadcast %cst_5 : f32 to vector<64x128xf32>
    %7 = arith.maximumf %5, %6 : vector<64x128xf32>
    %8 = arith.truncf %7 : vector<64x128xf32> to vector<64x128xbf16>
    %c0_6 = arith.constant 0 : index
    %c0_7 = arith.constant 0 : index
    %9 = vector.load %arg4[%c0_6, %c0_7] : memref<128x768xbf16, #tpu.memory_space<vmem>>, vector<128x768xbf16>
    %cst_8 = arith.constant dense<0.000000e+00> : vector<64x768xf32>
    %10 = tpu.matmul %8, %9, %cst_8 {dimension_numbers = #tpu.dot_dimension_numbers<[1], [0], [0], [1], [0, 0, 1, 1], [], []>} : vector<64x128xbf16>, vector<128x768xbf16>, vector<64x768xf32> -> vector<64x768xf32>
    %c0_9 = arith.constant 0 : index
    %c0_10 = arith.constant 0 : index
    %11 = vector.load %arg5[%c0_9, %c0_10] : memref<1x768xf32, #tpu.memory_space<vmem>>, vector<1x768xf32>
    %12 = vector.broadcast %11 : vector<1x768xf32> to vector<64x768xf32>
    %13 = arith.addf %10, %12 : vector<64x768xf32>
    %14 = arith.truncf %13 : vector<64x768xf32> to vector<64x768xbf16>
    %c0_11 = arith.constant 0 : index
    %c0_12 = arith.constant 0 : index
    %15 = vector.load %arg6[%c0_11, %c0_12] : memref<64x768xbf16, #tpu.memory_space<vmem>>, vector<64x768xbf16>
    tpu.vector_store %arg6[%c0_11, %c0_12], %14 {strides = array<i32>} : memref<64x768xbf16, #tpu.memory_space<vmem>>, vector<64x768xbf16>,
    return
  }
  func.func @transform_0(%arg0: i32) -> (i32, i32) {
    %c0_i32 = arith.constant 0 : i32
    %c0_i32_0 = arith.constant 0 : i32
    return %arg0, %c0_i32 : i32, i32
  }
  func.func @transform_1(%arg0: i32) -> (i32, i32) {
    %c0_i32 = arith.constant 0 : i32
    %c0_i32_0 = arith.constant 0 : i32
    %c0_i32_1 = arith.constant 0 : i32
    return %c0_i32, %c0_i32_0 : i32, i32
  }
  func.func @transform_2(%arg0: i32) -> (i32, i32) {
    %c0_i32 = arith.constant 0 : i32
    %c0_i32_0 = arith.constant 0 : i32
    %c0_i32_1 = arith.constant 0 : i32
    return %c0_i32, %c0_i32_0 : i32, i32
  }
  func.func @transform_3(%arg0: i32) -> (i32, i32) {
    %c0_i32 = arith.constant 0 : i32
    %c0_i32_0 = arith.constant 0 : i32
    %c0_i32_1 = arith.constant 0 : i32
    return %c0_i32, %c0_i32_0 : i32, i32
  }
  func.func @transform_4(%arg0: i32) -> (i32, i32) {
    %c0_i32 = arith.constant 0 : i32
    %c0_i32_0 = arith.constant 0 : i32
    %c0_i32_1 = arith.constant 0 : i32
    return %c0_i32, %c0_i32_0 : i32, i32
  }
  func.func @transform_5(%arg0: i32) -> (i32, i32) {
    %c0_i32 = arith.constant 0 : i32
    %c0_i32_0 = arith.constant 0 : i32
    return %arg0, %c0_i32 : i32, i32
  }
}

</mosaic_0001>

<llo_original>
// kernel: stdn_forward.1
$region0: #{stdn_forward.1}
  #allocation0 [shape = 'u32[]', space=smem, size = 0x4, offset = 0x4, fixed_abs, tag = 'smem constant byte address 0x4 - core index']
  #allocation1 [shape = 'u32[144,128]{1,0:T(1,128)}', space=vmem, size = 0x12000, scoped, tag = 'internal scratch']
  %s0 = inlined_call_operand.vmem [shape: bf16[128,4], index: 0, kind: input, shape index: {}]
  %s1 = inlined_call_operand.vmem [shape: bf16[4,128], index: 1, kind: input, shape index: {}]
  %s2 = inlined_call_operand.vmem [shape: f32[1,128], index: 2, kind: input, shape index: {}]
  %s3 = inlined_call_operand.vmem [shape: bf16[128,768], index: 3, kind: input, shape index: {}]
  %s4 = inlined_call_operand.vmem [shape: f32[1,768], index: 4, kind: input, shape index: {}]
  %s5 = inlined_call_operand.vmem [shape: bf16[128,768], index: 5, kind: output, shape index: {}]
  %s6 = sld [smem:[#allocation0]]
  $region53: #{stdn_forward.1} parent=0
    _
  %s8 = ssub.s32 1, %s6
  %s9 = scalar_select 0, %s8, %s6
  loop: start=0, step=1, limit=4
  $region2: #{stdn_forward.1} parent=0 // loop_pre_header
    _
  $region3: #{stdn_forward.1} parent=0 // loop_header
    %s11 = sphi 0, %s15
    %p12 = scmp.ge.s32.totalorder %s11, 4
    %s21 = sphi 0, %s23
    %s24 = sphi 0, %s21
    %s25 = sphi 0, %s24
    %s41 = sphi 0, %s25
    %s45 = sphi 0, %s45
    %s47 = sphi 0, %s45
    %s48 = sphi 0, %s47
    %s62 = sphi 0, %s48
    %s66 = sphi 0, %s66
    %s68 = sphi 0, %s66
    %s69 = sphi 0, %s68
    %s83 = sphi 0, %s69
    %s87 = sphi 0, %s87
    %s89 = sphi 0, %s87
    %s90 = sphi 0, %s89
    %s104 = sphi 0, %s90
    %s108 = sphi 0, %s108
    %s110 = sphi 0, %s108
    %s111 = sphi 0, %s110
    %s125 = sphi 0, %s111
    %s131 = sphi 0, %s133
    %s134 = sphi 0, %s131
    %s135 = sphi 0, %s134
    %s151 = sphi 0, %s135
  $region4: #{stdn_forward.1} parent=0 // loop_header_branch
    %14 = sbr.rel (%p12) target = $region8
  $region5: #{stdn_forward.1} parent=0 // loop_body
    %s16 = ssub.s32 %s11, 1
    %s17 = ssub.s32 %s11, 2
    %s18 = sadd.s32 %s11, 1
    %s19 = ssub.s32 %s11, %s18
    %p20 = scmp.eq.s32.totalorder %s19, 0
    %s22 = sadd.s32 %s21, 1
    %s23 = scalar_select %p20, %s21, %s22
    %p26 = pneg %p20
    %p27 = scmp.eq.s32.totalorder %s11, 1
    %p28 = por %p26, %p27
    %p29 = scmp.ne.s32.totalorder %s21, %s24
    %p30 = scmp.eq.s32.totalorder %s11, 0
    %p31 = por %p29, %p30
    %p32 = scmp.ne.s32.totalorder %s21, %s24
    %p33 = scmp.eq.s32.totalorder %s16, 1
    %p34 = por %p32, %p33
    %p35 = scmp.ne.s32.totalorder %s24, %s25
    %p36 = scmp.eq.s32.totalorder %s16, 0
    %p37 = por %p35, %p36
    %p38 = scmp.ne.s32.totalorder %s24, %s25
    %p39 = scmp.eq.s32.totalorder %s17, 1
    %p40 = por %p38, %p39
    %p42 = scmp.ne.s32.totalorder %s25, %s41
    %p43 = scmp.eq.s32.totalorder %s17, 0
    %p44 = por %p42, %p43
    %s46 = sadd.s32 %s45, 1
    %p49 = scmp.eq.s32.totalorder %s11, 1
    %p50 = scmp.ne.s32.totalorder %s45, %s47
    %p51 = scmp.eq.s32.totalorder %s11, 0
    %p52 = por %p50, %p51
    %p53 = scmp.ne.s32.totalorder %s45, %s47
    %p54 = scmp.eq.s32.totalorder %s16, 1
    %p55 = por %p53, %p54
    %p56 = scmp.ne.s32.totalorder %s47, %s48
    %p57 = scmp.eq.s32.totalorder %s16, 0
    %p58 = por %p56, %p57
    %p59 = scmp.ne.s32.totalorder %s47, %s48
    %p60 = scmp.eq.s32.totalorder %s17, 1
    %p61 = por %p59, %p60
    %p63 = scmp.ne.s32.totalorder %s48, %s62
    %p64 = scmp.eq.s32.totalorder %s17, 0
    %p65 = por %p63, %p64
    %s67 = sadd.s32 %s66, 1
    %p70 = scmp.eq.s32.totalorder %s11, 1
    %p71 = scmp.ne.s32.totalorder %s66, %s68
    %p72 = scmp.eq.s32.totalorder %s11, 0
    %p73 = por %p71, %p72
    %p74 = scmp.ne.s32.totalorder %s66, %s68
    %p75 = scmp.eq.s32.totalorder %s16, 1
    %p76 = por %p74, %p75
    %p77 = scmp.ne.s32.totalorder %s68, %s69
    %p78 = scmp.eq.s32.totalorder %s16, 0
    %p79 = por %p77, %p78
    %p80 = scmp.ne.s32.totalorder %s68, %s69
    %p81 = scmp.eq.s32.totalorder %s17, 1
    %p82 = por %p80, %p81
    %p84 = scmp.ne.s32.totalorder %s69, %s83
    %p85 = scmp.eq.s32.totalorder %s17, 0
    %p86 = por %p84, %p85
    %s88 = sadd.s32 %s87, 1
    %p91 = scmp.eq.s32.totalorder %s11, 1
    %p92 = scmp.ne.s32.totalorder %s87, %s89
    %p93 = scmp.eq.s32.totalorder %s11, 0
    %p94 = por %p92, %p93
    %p95 = scmp.ne.s32.totalorder %s87, %s89
    %p96 = scmp.eq.s32.totalorder %s16, 1
    %p97 = por %p95, %p96
    %p98 = scmp.ne.s32.totalorder %s89, %s90
    %p99 = scmp.eq.s32.totalorder %s16, 0
    %p100 = por %p98, %p99
    %p101 = scmp.ne.s32.totalorder %s89, %s90
    %p102 = scmp.eq.s32.totalorder %s17, 1
    %p103 = por %p101, %p102
    %p105 = scmp.ne.s32.totalorder %s90, %s104
    %p106 = scmp.eq.s32.totalorder %s17, 0
    %p107 = por %p105, %p106
    %s109 = sadd.s32 %s108, 1
    %p112 = scmp.eq.s32.totalorder %s11, 1
    %p113 = scmp.ne.s32.totalorder %s108, %s110
    %p114 = scmp.eq.s32.totalorder %s11, 0
    %p115 = por %p113, %p114
    %p116 = scmp.ne.s32.totalorder %s108, %s110
    %p117 = scmp.eq.s32.totalorder %s16, 1
    %p118 = por %p116, %p117
    %p119 = scmp.ne.s32.totalorder %s110, %s111
    %p120 = scmp.eq.s32.totalorder %s16, 0
    %p121 = por %p119, %p120
    %p122 = scmp.ne.s32.totalorder %s110, %s111
    %p123 = scmp.eq.s32.totalorder %s17, 1
    %p124 = por %p122, %p123
    %p126 = scmp.ne.s32.totalorder %s111, %s125
    %p127 = scmp.eq.s32.totalorder %s17, 0
    %p128 = por %p126, %p127
    %s129 = ssub.s32 %s11, %s18
    %p130 = scmp.eq.s32.totalorder %s129, 0
    %s132 = sadd.s32 %s131, 1
    %s133 = scalar_select %p130, %s131, %s132
    %p136 = pneg %p130
    %p137 = scmp.eq.s32.totalorder %s11, 1
    %p138 = por %p136, %p137
    %p139 = scmp.ne.s32.totalorder %s131, %s134
    %p140 = scmp.eq.s32.totalorder %s11, 0
    %p141 = por %p139, %p140
    %p142 = scmp.ne.s32.totalorder %s131, %s134
    %p143 = scmp.eq.s32.totalorder %s16, 1
    %p144 = por %p142, %p143
    %p145 = scmp.ne.s32.totalorder %s134, %s135
    %p146 = scmp.eq.s32.totalorder %s16, 0
    %p147 = por %p145, %p146
    %p148 = scmp.ne.s32.totalorder %s134, %s135
    %p149 = scmp.eq.s32.totalorder %s17, 1
    %p150 = por %p148, %p149
    %p152 = scmp.ne.s32.totalorder %s135, %s151
    %p153 = scmp.eq.s32.totalorder %s17, 0
    %p154 = por %p152, %p153
    %p155 = scmp.le.s32.totalorder 1, %s11
    %p156 = scmp.lt.s32.totalorder %s11, 3
    %p157 = pnand %p155, %p156
    %p158 = pneg %p157
    // Predicated region
    $region9: #{stdn_forward.1} parent=5 // pred_check
      _
    $region10: #{stdn_forward.1} parent=5 // pred_check_branch
      %160 = sbr.rel (%p157) target = $region12
    $region11: #{stdn_forward.1} parent=5 // pred_region
      %s161 = ssub.s32 %s11, 1
      // Predicated region
      $region13: #{stdn_forward.1} parent=11 // pred_check
        %p162 = pneg %p58
      $region14: #{stdn_forward.1} parent=11 // pred_check_branch
        %164 = sbr.rel (%p162) target = $region16
      $region15: #{stdn_forward.1} parent=11 // pred_region
        _
      $region16: #{stdn_forward.1} parent=11 // pred_fallthru
        _
      // Predicated region
      $region17: #{stdn_forward.1} parent=11 // pred_check
        %p165 = pneg %p79
      $region18: #{stdn_forward.1} parent=11 // pred_check_branch
        %167 = sbr.rel (%p165) target = $region20
      $region19: #{stdn_forward.1} parent=11 // pred_region
        _
      $region20: #{stdn_forward.1} parent=11 // pred_fallthru
        _
      // Predicated region
      $region21: #{stdn_forward.1} parent=11 // pred_check
        %p168 = pneg %p100
      $region22: #{stdn_forward.1} parent=11 // pred_check_branch
        %170 = sbr.rel (%p168) target = $region24
      $region23: #{stdn_forward.1} parent=11 // pred_region
        _
      $region24: #{stdn_forward.1} parent=11 // pred_fallthru
        _
      // Predicated region
      $region25: #{stdn_forward.1} parent=11 // pred_check
        %p171 = pneg %p121
      $region26: #{stdn_forward.1} parent=11 // pred_check_branch
        %173 = sbr.rel (%p171) target = $region28
      $region27: #{stdn_forward.1} parent=11 // pred_region
        _
      $region28: #{stdn_forward.1} parent=11 // pred_fallthru
        _
    $region12: #{stdn_forward.1} parent=5 // pred_fallthru
      _
    %p174 = scmp.lt.s32.totalorder %s11, 2
    // Predicated region
    $region29: #{stdn_forward.1} parent=5 // pred_check
      %p175 = pneg %p174
    $region30: #{stdn_forward.1} parent=5 // pred_check_branch
      %177 = sbr.rel (%p175) target = $region32
    $region31: #{stdn_forward.1} parent=5 // pred_region
      // Predicated region
      $region33: #{stdn_forward.1} parent=31 // pred_check
        %p178 = pneg %p31
      $region34: #{stdn_forward.1} parent=31 // pred_check_branch
        %180 = sbr.rel (%p178) target = $region36
      $region35: #{stdn_forward.1} parent=31 // pred_region
        %s181 = smul.u32 8, %s11
        %p182 = scmp.lt.s32.totalorder %s181, 15
        %s183 = scalar_select %p182, %s181, 15
        %s184 = smul.addr %s183, 4
        %s185 = scalar_lea.vmem %s0, %s184
        %s186 = smul.u32 8, %s11
      $region36: #{stdn_forward.1} parent=31 // pred_fallthru
        _
    $region32: #{stdn_forward.1} parent=5 // pred_fallthru
      _
    %p187 = scmp.le.s32.totalorder 1, %s11
    %p188 = scmp.lt.s32.totalorder %s11, 3
    %p189 = pnand %p187, %p188
    %p190 = pneg %p189
    // Predicated region
    $region37: #{stdn_forward.1} parent=5 // pred_check
      _
    $region38: #{stdn_forward.1} parent=5 // pred_check_branch
      %192 = sbr.rel (%p189) target = $region40
    $region39: #{stdn_forward.1} parent=5 // pred_region
      %s193 = ssub.s32 %s11, 1
      %s194 = smul.u32 8, %s16
      %p195 = scmp.lt.s32.totalorder %s194, 15
      %s196 = scalar_select %p195, %s194, 15
      %s197 = smul.addr %s196, 4
      %s198 = scalar_lea.vmem %s0, %s197
      %p199 = pneg %p37
      %p200 = pneg %p34
      %p201 = pneg %p58
      %p202 = pneg %p55
      %p203 = pneg %p79
      %p204 = pneg %p76
      %p205 = pneg %p100
      %p206 = pneg %p97
      %p207 = pneg %p121
      %p208 = pneg %p118
      %p209 = pneg %p147
      %p210 = pneg %p144
      %s211 = smul.u32 8, %s16
      %p212 = scmp.lt.s32.totalorder %s211, 15
      %s213 = scalar_select %p212, %s211, 15
      %s214 = smul.addr %s213, 6
      %s215 = smul.addr %s214, 4
      %s216 = scalar_lea.vmem %s5, %s215
      %s217 = smul.u32 8, %s16
      %p218 = scmp.lt.s32.totalorder %s217, 15
      %s219 = scalar_select %p218, %s217, 15
      %s220 = smul.addr %s219, 4
      %s221 = scalar_lea.vmem %s0, %s220
      %s222 = smul.u32 8, %s16
      %s223 = smul.u32 8, %s16
      %p224 = scmp.lt.s32.totalorder %s223, 15
      %s225 = scalar_select %p224, %s223, 15
      %s226 = smul.addr %s225, 6
      %s227 = smul.addr %s226, 4
      %s228 = scalar_lea.vmem %s5, %s227
      %s229 = smul.u32 8, %s16
      %v231 = vld [vmem:[%s221] sm:$0xf]
      %v232 = vld [vmem:[%s221 + $0x4] sm:$0xf]
      %v233 = vld [vmem:[%s221 + $0x8] sm:$0xf]
      %v234 = vld [vmem:[%s221 + $0xc] sm:$0xf]
      %v235 = vld [vmem:[%s221 + $0x10] sm:$0xf]
      %v236 = vld [vmem:[%s221 + $0x14] sm:$0xf]
      %v237 = vld [vmem:[%s221 + $0x18] sm:$0xf]
      %v238 = vld [vmem:[%s221 + $0x1c] sm:$0xf]
      %v239 = vld [vmem:[%s1] sm:$0x3]
      %v240 = vld [vmem:[%s2] sm:$0x1]
      %v242 = vlaneseq
      %v243 = vshrl.u32 %v242, 7
      %v244 = vsub.s32 0, %v243
      %v245 = vrot.slane %v240, %v244
      %v255 = vunpack.c.l.b16 %v231
      %v256 = vunpack.c.l.b16 %v232
      %v257 = vunpack.c.l.b16 %v233
      %v258 = vunpack.c.l.b16 %v234
      %v259 = vunpack.c.l.b16 %v235
      %v260 = vunpack.c.l.b16 %v236
      %v261 = vunpack.c.l.b16 %v237
      %v262 = vunpack.c.l.b16 %v238
      %v263 = vpack.c.b16 %v256, %v255
      %v264 = vpack.c.b16 %v258, %v257
      %v265 = vpack.c.b16 %v260, %v259
      %v266 = vpack.c.b16 %v262, %v261
      %vm267 = vcmask 31744
      %v269 = vsel %vm267, %v263, 0
      %v272 = vsel %vm267, %v264, 0
      %v275 = vsel %vm267, %v265, 0
      %v278 = vsel %vm267, %v266, 0
      %vm280 = vcmask 1041408
      %v282 = vsel %vm280, %v239, 0
      %284 = vmatprep.subr.bf16.mxu0 0
      %285 = vmatpush1.bf16.msra.mxu0 0
      %286 = vmatprep.subr.bf16.mxu0 0
      %287 = vmatpush1.bf16.msra.mxu0 0
      %288 = vmatprep.subr.bf16.mxu0 0
      %289 = vmatpush1.bf16.msra.mxu0 0
      %290 = vmatprep.subr.bf16.mxu0 0
      %291 = vmatpush1.bf16.msra.mxu0 0
      %292 = vmatprep.subr.bf16.mxu0 0
      %293 = vmatpush1.bf16.msra.mxu0 0
      %294 = vmatprep.subr.bf16.mxu0 0
      %295 = vmatpush1.bf16.msra.mxu0 0
      %296 = vmatprep.subr.bf16.mxu0 0
      %297 = vmatpush1.bf16.msra.mxu0 0
      %298 = vmatprep.subr.bf16.mxu0 0
      %299 = vmatpush1.bf16.msra.mxu0 %v282
      %300 = vmatprep.subr.bf16.mxu0 0
      %301 = vmatpush2.bf16.msra.mxu0 0
      %302 = vmatprep.subr.bf16.mxu0 0
      %303 = vmatpush2.bf16.msra.mxu0 0
      %304 = vmatprep.subr.bf16.mxu0 0
      %305 = vmatpush2.bf16.msra.mxu0 0
      %306 = vmatprep.subr.bf16.mxu0 0
      %307 = vmatpush2.bf16.msra.mxu0 0
      %308 = vmatprep.subr.bf16.mxu0 0
      %309 = vmatpush2.bf16.msra.mxu0 0
      %310 = vmatprep.subr.bf16.mxu0 0
      %311 = vmatpush2.bf16.msra.mxu0 0
      %312 = vmatprep.subr.bf16.mxu0 0
      %313 = vmatpush2.bf16.msra.mxu0 0
      %314 = vmatprep.subr.bf16.mxu0 0
      %315 = vmatpush2.bf16.msra.mxu0 0
      %316 = vmatprep.mubr.bf16.mxu0 0
      %317 = vmatmul.mubr.bf16.gmra.mxu0 %v269
      %v318 = vpop.f32.mrf.mxu0
      %v319 = vadd.f32 %v245, %v318
      %v320 = vpop.f32.mrf.mxu0
      %v321 = vpop.f32.mrf.mxu0
      %v322 = vadd.f32 %v245, %v321
      %v323 = vpop.f32.mrf.mxu0
      %324 = vmatprep.mubr.bf16.mxu0 0
      %325 = vmatmul.mubr.bf16.gmra.mxu0 %v272
      %v326 = vpop.f32.mrf.mxu0
      %v327 = vadd.f32 %v245, %v326
      %v328 = vpop.f32.mrf.mxu0
      %v329 = vpop.f32.mrf.mxu0
      %v330 = vadd.f32 %v245, %v329
      %v331 = vpop.f32.mrf.mxu0
      %332 = vmatprep.mubr.bf16.mxu0 0
      %333 = vmatmul.mubr.bf16.gmra.mxu0 %v275
      %v334 = vpop.f32.mrf.mxu0
      %v335 = vadd.f32 %v245, %v334
      %v336 = vpop.f32.mrf.mxu0
      %v337 = vpop.f32.mrf.mxu0
      %v338 = vadd.f32 %v245, %v337
      %v339 = vpop.f32.mrf.mxu0
      %340 = vmatprep.mubr.bf16.mxu0 0
      %341 = vmatmul.mubr.bf16.gmra.mxu0 %v278
      %v342 = vpop.f32.mrf.mxu0
      %v343 = vadd.f32 %v245, %v342
      %v344 = vpop.f32.mrf.mxu0
      %v345 = vpop.f32.mrf.mxu0
      %v346 = vadd.f32 %v245, %v345
      %v347 = vpop.f32.mrf.mxu0
      %348 = vdwg.mxu0
      %v349 = vmax.f32 %v319, 0.0
      %v350 = vmax.f32 %v322, 0.0
      %v351 = vmax.f32 %v327, 0.0
      %v352 = vmax.f32 %v330, 0.0
      %v353 = vmax.f32 %v335, 0.0
      %v354 = vmax.f32 %v338, 0.0
      %v355 = vmax.f32 %v343, 0.0
      %v356 = vmax.f32 %v346, 0.0
      %v357 = vpack.c.bf16 %v350, %v349
      %v358 = vpack.c.bf16 %v352, %v351
      %v359 = vpack.c.bf16 %v354, %v353
      %v360 = vpack.c.bf16 %v356, %v355
      %v361 = vld [vmem:[%s3] sm:$0xff]
      %v362 = vld [vmem:[%s3 + $0x8] sm:$0xff]
      %v363 = vld [vmem:[%s3 + $0x10] sm:$0xff]
      %v364 = vld [vmem:[%s3 + $0x18] sm:$0xff]
      %v365 = vld [vmem:[%s3 + $0x20] sm:$0xff]
      %v366 = vld [vmem:[%s3 + $0x28] sm:$0xff]
      %v367 = vld [vmem:[%s3 + $0x30] sm:$0xff]
      %v368 = vld [vmem:[%s3 + $0x38] sm:$0xff]
      %v369 = vld [vmem:[%s3 + $0x40] sm:$0xff]
      %v370 = vld [vmem:[%s3 + $0x48] sm:$0xff]
      %v371 = vld [vmem:[%s3 + $0x50] sm:$0xff]
      %v372 = vld [vmem:[%s3 + $0x58] sm:$0xff]
      %v373 = vld [vmem:[%s3 + $0x60] sm:$0xff]
      %v374 = vld [vmem:[%s3 + $0x68] sm:$0xff]
      %v375 = vld [vmem:[%s3 + $0x70] sm:$0xff]
      %v376 = vld [vmem:[%s3 + $0x78] sm:$0xff]
      %v377 = vld [vmem:[%s3 + $0x80] sm:$0xff]
      %v378 = vld [vmem:[%s3 + $0x88] sm:$0xff]
      %v379 = vld [vmem:[%s3 + $0x90] sm:$0xff]
      %v380 = vld [vmem:[%s3 + $0x98] sm:$0xff]
      %v381 = vld [vmem:[%s3 + $0xa0] sm:$0xff]
      %v382 = vld [vmem:[%s3 + $0xa8] sm:$0xff]
      %v383 = vld [vmem:[%s3 + $0xb0] sm:$0xff]
      %v384 = vld [vmem:[%s3 + $0xb8] sm:$0xff]
      %v385 = vld [vmem:[%s3 + $0xc0] sm:$0xff]
      %v386 = vld [vmem:[%s3 + $0xc8] sm:$0xff]
      %v387 = vld [vmem:[%s3 + $0xd0] sm:$0xff]
      %v388 = vld [vmem:[%s3 + $0xd8] sm:$0xff]
      %v389 = vld [vmem:[%s3 + $0xe0] sm:$0xff]
      %v390 = vld [vmem:[%s3 + $0xe8] sm:$0xff]
      %v391 = vld [vmem:[%s3 + $0xf0] sm:$0xff]
      %v392 = vld [vmem:[%s3 + $0xf8] sm:$0xff]
      %v393 = vld [vmem:[%s3 + $0x100] sm:$0xff]
      %v394 = vld [vmem:[%s3 + $0x108] sm:$0xff]
      %v395 = vld [vmem:[%s3 + $0x110] sm:$0xff]
      %v396 = vld [vmem:[%s3 + $0x118] sm:$0xff]
      %v397 = vld [vmem:[%s3 + $0x120] sm:$0xff]
      %v398 = vld [vmem:[%s3 + $0x128] sm:$0xff]
      %v399 = vld [vmem:[%s3 + $0x130] sm:$0xff]
      %v400 = vld [vmem:[%s3 + $0x138] sm:$0xff]
      %v401 = vld [vmem:[%s3 + $0x140] sm:$0xff]
      %v402 = vld [vmem:[%s3 + $0x148] sm:$0xff]
      %v403 = vld [vmem:[%s3 + $0x150] sm:$0xff]
      %v404 = vld [vmem:[%s3 + $0x158] sm:$0xff]
      %v405 = vld [vmem:[%s3 + $0x160] sm:$0xff]
      %v406 = vld [vmem:[%s3 + $0x168] sm:$0xff]
      %v407 = vld [vmem:[%s3 + $0x170] sm:$0xff]
      %v408 = vld [vmem:[%s3 + $0x178] sm:$0xff]
      %v409 = vld [vmem:[%s4] sm:$0x3f]
      %v411 = vlaneseq
      %v412 = vshrl.u32 %v411, 7
      %v413 = vsub.s32 0, %v412
      %v414 = vrot.slane %v409, %v413
      %v415 = vlaneseq
      %v416 = vshrl.u32 %v415, 7
      %v417 = vsub.s32 1, %v416
      %v418 = vrot.slane %v409, %v417
      %v419 = vlaneseq
      %v420 = vshrl.u32 %v419, 7
      %v421 = vsub.s32 2, %v420
      %v422 = vrot.slane %v409, %v421
      %v423 = vlaneseq
      %v424 = vshrl.u32 %v423, 7
      %v425 = vsub.s32 3, %v424
      %v426 = vrot.slane %v409, %v425
      %v427 = vlaneseq
      %v428 = vshrl.u32 %v427, 7
      %v429 = vsub.s32 4, %v428
      %v430 = vrot.slane %v409, %v429
      %v431 = vlaneseq
      %v432 = vshrl.u32 %v431, 7
      %v433 = vsub.s32 5, %v432
      %v434 = vrot.slane %v409, %v433
      %v489 = vunpack.c.l.b16 %v361
      %v490 = vunpack.c.h.b16 %v361
      %v491 = vunpack.c.l.b16 %v362
      %v492 = vunpack.c.h.b16 %v362
      %v493 = vunpack.c.l.b16 %v363
      %v494 = vunpack.c.h.b16 %v363
      %v495 = vunpack.c.l.b16 %v364
      %v496 = vunpack.c.h.b16 %v364
      %v497 = vunpack.c.l.b16 %v365
      %v498 = vunpack.c.h.b16 %v365
      %v499 = vunpack.c.l.b16 %v366
      %v500 = vunpack.c.h.b16 %v366
      %v501 = vunpack.c.l.b16 %v367
      %v502 = vunpack.c.h.b16 %v367
      %v503 = vunpack.c.l.b16 %v368
      %v504 = vunpack.c.h.b16 %v368
      %v505 = vunpack.c.l.b16 %v369
      %v506 = vunpack.c.h.b16 %v369
      %v507 = vunpack.c.l.b16 %v370
      %v508 = vunpack.c.h.b16 %v370
      %v509 = vunpack.c.l.b16 %v371
      %v510 = vunpack.c.h.b16 %v371
      %v511 = vunpack.c.l.b16 %v372
      %v512 = vunpack.c.h.b16 %v372
      %v513 = vunpack.c.l.b16 %v373
      %v514 = vunpack.c.h.b16 %v373
      %v515 = vunpack.c.l.b16 %v374
      %v516 = vunpack.c.h.b16 %v374
      %v517 = vunpack.c.l.b16 %v375
      %v518 = vunpack.c.h.b16 %v375
      %v519 = vunpack.c.l.b16 %v376
      %v520 = vunpack.c.h.b16 %v376
      %v521 = vunpack.c.l.b16 %v377
      %v522 = vunpack.c.h.b16 %v377
      %v523 = vunpack.c.l.b16 %v378
      %v524 = vunpack.c.h.b16 %v378
      %v525 = vunpack.c.l.b16 %v379
      %v526 = vunpack.c.h.b16 %v379
      %v527 = vunpack.c.l.b16 %v380
      %v528 = vunpack.c.h.b16 %v380
      %v529 = vunpack.c.l.b16 %v381
      %v530 = vunpack.c.h.b16 %v381
      %v531 = vunpack.c.l.b16 %v382
      %v532 = vunpack.c.h.b16 %v382
      %v533 = vunpack.c.l.b16 %v383
      %v534 = vunpack.c.h.b16 %v383
      %v535 = vunpack.c.l.b16 %v384
      %v536 = vunpack.c.h.b16 %v384
      %v537 = vunpack.c.l.b16 %v385
      %v538 = vunpack.c.h.b16 %v385
      %v539 = vunpack.c.l.b16 %v386
      %v540 = vunpack.c.h.b16 %v386
      %v541 = vunpack.c.l.b16 %v387
      %v542 = vunpack.c.h.b16 %v387
      %v543 = vunpack.c.l.b16 %v388
      %v544 = vunpack.c.h.b16 %v388
      %v545 = vunpack.c.l.b16 %v389
      %v546 = vunpack.c.h.b16 %v389
      %v547 = vunpack.c.l.b16 %v390
      %v548 = vunpack.c.h.b16 %v390
      %v549 = vunpack.c.l.b16 %v391
      %v550 = vunpack.c.h.b16 %v391
      %v551 = vunpack.c.l.b16 %v392
      %v552 = vunpack.c.h.b16 %v392
      %v553 = vunpack.c.l.b16 %v393
      %v554 = vunpack.c.h.b16 %v393
      %v555 = vunpack.c.l.b16 %v394
      %v556 = vunpack.c.h.b16 %v394
      %v557 = vunpack.c.l.b16 %v395
      %v558 = vunpack.c.h.b16 %v395
      %v559 = vunpack.c.l.b16 %v396
      %v560 = vunpack.c.h.b16 %v396
      %v561 = vunpack.c.l.b16 %v397
      %v562 = vunpack.c.h.b16 %v397
      %v563 = vunpack.c.l.b16 %v398
      %v564 = vunpack.c.h.b16 %v398
      %v565 = vunpack.c.l.b16 %v399
      %v566 = vunpack.c.h.b16 %v399
      %v567 = vunpack.c.l.b16 %v400
      %v568 = vunpack.c.h.b16 %v400
      %v569 = vunpack.c.l.b16 %v401
      %v570 = vunpack.c.h.b16 %v401
      %v571 = vunpack.c.l.b16 %v402
      %v572 = vunpack.c.h.b16 %v402
      %v573 = vunpack.c.l.b16 %v403
      %v574 = vunpack.c.h.b16 %v403
      %v575 = vunpack.c.l.b16 %v404
      %v576 = vunpack.c.h.b16 %v404
      %v577 = vunpack.c.l.b16 %v405
      %v578 = vunpack.c.h.b16 %v405
      %v579 = vunpack.c.l.b16 %v406
      %v580 = vunpack.c.h.b16 %v406
      %v581 = vunpack.c.l.b16 %v407
      %v582 = vunpack.c.h.b16 %v407
      %v583 = vunpack.c.l.b16 %v408
      %v584 = vunpack.c.h.b16 %v408
      %v585 = vpack.c.b16 %v495, %v489
      %v586 = vpack.c.b16 %v496, %v490
      %v587 = vpack.c.b16 %v497, %v491
      %v588 = vpack.c.b16 %v498, %v492
      %v589 = vpack.c.b16 %v499, %v493
      %v590 = vpack.c.b16 %v500, %v494
      %v591 = vpack.c.b16 %v507, %v501
      %v592 = vpack.c.b16 %v508, %v502
      %v593 = vpack.c.b16 %v509, %v503
      %v594 = vpack.c.b16 %v510, %v504
      %v595 = vpack.c.b16 %v511, %v505
      %v596 = vpack.c.b16 %v512, %v506
      %v597 = vpack.c.b16 %v519, %v513
      %v598 = vpack.c.b16 %v520, %v514
      %v599 = vpack.c.b16 %v521, %v515
      %v600 = vpack.c.b16 %v522, %v516
      %v601 = vpack.c.b16 %v523, %v517
      %v602 = vpack.c.b16 %v524, %v518
      %v603 = vpack.c.b16 %v531, %v525
      %v604 = vpack.c.b16 %v532, %v526
      %v605 = vpack.c.b16 %v533, %v527
      %v606 = vpack.c.b16 %v534, %v528
      %v607 = vpack.c.b16 %v535, %v529
      %v608 = vpack.c.b16 %v536, %v530
      %v609 = vpack.c.b16 %v543, %v537
      %v610 = vpack.c.b16 %v544, %v538
      %v611 = vpack.c.b16 %v545, %v539
      %v612 = vpack.c.b16 %v546, %v540
      %v613 = vpack.c.b16 %v547, %v541
      %v614 = vpack.c.b16 %v548, %v542
      %v615 = vpack.c.b16 %v555, %v549
      %v616 = vpack.c.b16 %v556, %v550
      %v617 = vpack.c.b16 %v557, %v551
      %v618 = vpack.c.b16 %v558, %v552
      %v619 = vpack.c.b16 %v559, %v553
      %v620 = vpack.c.b16 %v560, %v554
      %v621 = vpack.c.b16 %v567, %v561
      %v622 = vpack.c.b16 %v568, %v562
      %v623 = vpack.c.b16 %v569, %v563
      %v624 = vpack.c.b16 %v570, %v564
      %v625 = vpack.c.b16 %v571, %v565
      %v626 = vpack.c.b16 %v572, %v566
      %v627 = vpack.c.b16 %v579, %v573
      %v628 = vpack.c.b16 %v580, %v574
      %v629 = vpack.c.b16 %v581, %v575
      %v630 = vpack.c.b16 %v582, %v576
      %v631 = vpack.c.b16 %v583, %v577
      %v632 = vpack.c.b16 %v584, %v578
      %681 = vmatprep.subr.bf16.mxu0 %v628
      %682 = vmatpush1.bf16.msra.mxu0 %v627
      %683 = vmatprep.subr.bf16.mxu0 %v622
      %684 = vmatpush1.bf16.msra.mxu0 %v621
      %685 = vmatprep.subr.bf16.mxu0 %v616
      %686 = vmatpush1.bf16.msra.mxu0 %v615
      %687 = vmatprep.subr.bf16.mxu0 %v610
      %688 = vmatpush1.bf16.msra.mxu0 %v609
      %689 = vmatprep.subr.bf16.mxu0 %v604
      %690 = vmatpush1.bf16.msra.mxu0 %v603
      %691 = vmatprep.subr.bf16.mxu0 %v598
      %692 = vmatpush1.bf16.msra.mxu0 %v597
      %693 = vmatprep.subr.bf16.mxu0 %v592
      %694 = vmatpush1.bf16.msra.mxu0 %v591
      %695 = vmatprep.subr.bf16.mxu0 %v586
      %696 = vmatpush1.bf16.msra.mxu0 %v585
      %697 = vmatprep.subr.bf16.mxu0 0
      %698 = vmatpush2.bf16.msra.mxu0 0
      %699 = vmatprep.subr.bf16.mxu0 0
      %700 = vmatpush2.bf16.msra.mxu0 0
      %701 = vmatprep.subr.bf16.mxu0 0
      %702 = vmatpush2.bf16.msra.mxu0 0
      %703 = vmatprep.subr.bf16.mxu0 0
      %704 = vmatpush2.bf16.msra.mxu0 0
      %705 = vmatprep.subr.bf16.mxu0 0
      %706 = vmatpush2.bf16.msra.mxu0 0
      %707 = vmatprep.subr.bf16.mxu0 0
      %708 = vmatpush2.bf16.msra.mxu0 0
      %709 = vmatprep.subr.bf16.mxu0 0
      %710 = vmatpush2.bf16.msra.mxu0 0
      %711 = vmatprep.subr.bf16.mxu0 0
      %712 = vmatpush2.bf16.msra.mxu0 0
      %713 = vmatprep.mubr.bf16.mxu0 0
      %714 = vmatmul.mubr.bf16.gmra.mxu0 %v357
      %v715 = vpop.f32.mrf.mxu0
      %v716 = vadd.f32 %v414, %v715
      %v717 = vpop.f32.mrf.mxu0
      %v718 = vadd.f32 %v418, %v717
      %v719 = vpop.f32.mrf.mxu0
      %v720 = vadd.f32 %v414, %v719
      %v721 = vpop.f32.mrf.mxu0
      %v722 = vadd.f32 %v418, %v721
      %723 = vmatprep.mubr.bf16.mxu0 0
      %724 = vmatmul.mubr.bf16.gmra.mxu0 %v358
      %v725 = vpop.f32.mrf.mxu0
      %v726 = vadd.f32 %v414, %v725
      %v727 = vpop.f32.mrf.mxu0
      %v728 = vadd.f32 %v418, %v727
      %v729 = vpop.f32.mrf.mxu0
      %v730 = vadd.f32 %v414, %v729
      %v731 = vpop.f32.mrf.mxu0
      %v732 = vadd.f32 %v418, %v731
      %733 = vmatprep.mubr.bf16.mxu0 0
      %734 = vmatmul.mubr.bf16.gmra.mxu0 %v359
      %v735 = vpop.f32.mrf.mxu0
      %v736 = vadd.f32 %v414, %v735
      %v737 = vpop.f32.mrf.mxu0
      %v738 = vadd.f32 %v418, %v737
      %v739 = vpop.f32.mrf.mxu0
      %v740 = vadd.f32 %v414, %v739
      %v741 = vpop.f32.mrf.mxu0
      %v742 = vadd.f32 %v418, %v741
      %743 = vmatprep.mubr.bf16.mxu0 0
      %744 = vmatmul.mubr.bf16.gmra.mxu0 %v360
      %v745 = vpop.f32.mrf.mxu0
      %v746 = vadd.f32 %v414, %v745
      %v747 = vpop.f32.mrf.mxu0
      %v748 = vadd.f32 %v418, %v747
      %v749 = vpop.f32.mrf.mxu0
      %v750 = vadd.f32 %v414, %v749
      %v751 = vpop.f32.mrf.mxu0
      %v752 = vadd.f32 %v418, %v751
      %753 = vdwg.mxu0
      %754 = vmatprep.subr.bf16.mxu0 %v630
      %755 = vmatpush1.bf16.msra.mxu0 %v629
      %756 = vmatprep.subr.bf16.mxu0 %v624
      %757 = vmatpush1.bf16.msra.mxu0 %v623
      %758 = vmatprep.subr.bf16.mxu0 %v618
      %759 = vmatpush1.bf16.msra.mxu0 %v617
      %760 = vmatprep.subr.bf16.mxu0 %v612
      %761 = vmatpush1.bf16.msra.mxu0 %v611
      %762 = vmatprep.subr.bf16.mxu0 %v606
      %763 = vmatpush1.bf16.msra.mxu0 %v605
      %764 = vmatprep.subr.bf16.mxu0 %v600
      %765 = vmatpush1.bf16.msra.mxu0 %v599
      %766 = vmatprep.subr.bf16.mxu0 %v594
      %767 = vmatpush1.bf16.msra.mxu0 %v593
      %768 = vmatprep.subr.bf16.mxu0 %v588
      %769 = vmatpush1.bf16.msra.mxu0 %v587
      %770 = vmatprep.subr.bf16.mxu0 0
      %771 = vmatpush2.bf16.msra.mxu0 0
      %772 = vmatprep.subr.bf16.mxu0 0
      %773 = vmatpush2.bf16.msra.mxu0 0
      %774 = vmatprep.subr.bf16.mxu0 0
      %775 = vmatpush2.bf16.msra.mxu0 0
      %776 = vmatprep.subr.bf16.mxu0 0
      %777 = vmatpush2.bf16.msra.mxu0 0
      %778 = vmatprep.subr.bf16.mxu0 0
      %779 = vmatpush2.bf16.msra.mxu0 0
      %780 = vmatprep.subr.bf16.mxu0 0
      %781 = vmatpush2.bf16.msra.mxu0 0
      %782 = vmatprep.subr.bf16.mxu0 0
      %783 = vmatpush2.bf16.msra.mxu0 0
      %784 = vmatprep.subr.bf16.mxu0 0
      %785 = vmatpush2.bf16.msra.mxu0 0
      %786 = vmatprep.mubr.bf16.mxu0 0
      %787 = vmatmul.mubr.bf16.gmra.mxu0 %v357
      %v788 = vpop.f32.mrf.mxu0
      %v789 = vadd.f32 %v422, %v788
      %v790 = vpop.f32.mrf.mxu0
      %v791 = vadd.f32 %v426, %v790
      %v792 = vpop.f32.mrf.mxu0
      %v793 = vadd.f32 %v422, %v792
      %v794 = vpop.f32.mrf.mxu0
      %v795 = vadd.f32 %v426, %v794
      %796 = vmatprep.mubr.bf16.mxu0 0
      %797 = vmatmul.mubr.bf16.gmra.mxu0 %v358
      %v798 = vpop.f32.mrf.mxu0
      %v799 = vadd.f32 %v422, %v798
      %v800 = vpop.f32.mrf.mxu0
      %v801 = vadd.f32 %v426, %v800
      %v802 = vpop.f32.mrf.mxu0
      %v803 = vadd.f32 %v422, %v802
      %v804 = vpop.f32.mrf.mxu0
      %v805 = vadd.f32 %v426, %v804
      %806 = vmatprep.mubr.bf16.mxu0 0
      %807 = vmatmul.mubr.bf16.gmra.mxu0 %v359
      %v808 = vpop.f32.mrf.mxu0
      %v809 = vadd.f32 %v422, %v808
      %v810 = vpop.f32.mrf.mxu0
      %v811 = vadd.f32 %v426, %v810
      %v812 = vpop.f32.mrf.mxu0
      %v813 = vadd.f32 %v422, %v812
      %v814 = vpop.f32.mrf.mxu0
      %v815 = vadd.f32 %v426, %v814
      %816 = vmatprep.mubr.bf16.mxu0 0
      %817 = vmatmul.mubr.bf16.gmra.mxu0 %v360
      %v818 = vpop.f32.mrf.mxu0
      %v819 = vadd.f32 %v422, %v818
      %v820 = vpop.f32.mrf.mxu0
      %v821 = vadd.f32 %v426, %v820
      %v822 = vpop.f32.mrf.mxu0
      %v823 = vadd.f32 %v422, %v822
      %v824 = vpop.f32.mrf.mxu0
      %v825 = vadd.f32 %v426, %v824
      %826 = vdwg.mxu0
      %827 = vmatprep.subr.bf16.mxu0 %v632
      %828 = vmatpush1.bf16.msra.mxu0 %v631
      %829 = vmatprep.subr.bf16.mxu0 %v626
      %830 = vmatpush1.bf16.msra.mxu0 %v625
      %831 = vmatprep.subr.bf16.mxu0 %v620
      %832 = vmatpush1.bf16.msra.mxu0 %v619
      %833 = vmatprep.subr.bf16.mxu0 %v614
      %834 = vmatpush1.bf16.msra.mxu0 %v613
      %835 = vmatprep.subr.bf16.mxu0 %v608
      %836 = vmatpush1.bf16.msra.mxu0 %v607
      %837 = vmatprep.subr.bf16.mxu0 %v602
      %838 = vmatpush1.bf16.msra.mxu0 %v601
      %839 = vmatprep.subr.bf16.mxu0 %v596
      %840 = vmatpush1.bf16.msra.mxu0 %v595
      %841 = vmatprep.subr.bf16.mxu0 %v590
      %842 = vmatpush1.bf16.msra.mxu0 %v589
      %843 = vmatprep.subr.bf16.mxu0 0
      %844 = vmatpush2.bf16.msra.mxu0 0
      %845 = vmatprep.subr.bf16.mxu0 0
      %846 = vmatpush2.bf16.msra.mxu0 0
      %847 = vmatprep.subr.bf16.mxu0 0
      %848 = vmatpush2.bf16.msra.mxu0 0
      %849 = vmatprep.subr.bf16.mxu0 0
      %850 = vmatpush2.bf16.msra.mxu0 0
      %851 = vmatprep.subr.bf16.mxu0 0
      %852 = vmatpush2.bf16.msra.mxu0 0
      %853 = vmatprep.subr.bf16.mxu0 0
      %854 = vmatpush2.bf16.msra.mxu0 0
      %855 = vmatprep.subr.bf16.mxu0 0
      %856 = vmatpush2.bf16.msra.mxu0 0
      %857 = vmatprep.subr.bf16.mxu0 0
      %858 = vmatpush2.bf16.msra.mxu0 0
      %859 = vmatprep.mubr.bf16.mxu0 0
      %860 = vmatmul.mubr.bf16.gmra.mxu0 %v357
      %v861 = vpop.f32.mrf.mxu0
      %v862 = vadd.f32 %v430, %v861
      %v863 = vpop.f32.mrf.mxu0
      %v864 = vadd.f32 %v434, %v863
      %v865 = vpop.f32.mrf.mxu0
      %v866 = vadd.f32 %v430, %v865
      %v867 = vpop.f32.mrf.mxu0
      %v868 = vadd.f32 %v434, %v867
      %869 = vmatprep.mubr.bf16.mxu0 0
      %870 = vmatmul.mubr.bf16.gmra.mxu0 %v358
      %v871 = vpop.f32.mrf.mxu0
      %v872 = vadd.f32 %v430, %v871
      %v873 = vpop.f32.mrf.mxu0
      %v874 = vadd.f32 %v434, %v873
      %v875 = vpop.f32.mrf.mxu0
      %v876 = vadd.f32 %v430, %v875
      %v877 = vpop.f32.mrf.mxu0
      %v878 = vadd.f32 %v434, %v877
      %879 = vmatprep.mubr.bf16.mxu0 0
      %880 = vmatmul.mubr.bf16.gmra.mxu0 %v359
      %v881 = vpop.f32.mrf.mxu0
      %v882 = vadd.f32 %v430, %v881
      %v883 = vpop.f32.mrf.mxu0
      %v884 = vadd.f32 %v434, %v883
      %v885 = vpop.f32.mrf.mxu0
      %v886 = vadd.f32 %v430, %v885
      %v887 = vpop.f32.mrf.mxu0
      %v888 = vadd.f32 %v434, %v887
      %889 = vmatprep.mubr.bf16.mxu0 0
      %890 = vmatmul.mubr.bf16.gmra.mxu0 %v360
      %v891 = vpop.f32.mrf.mxu0
      %v892 = vadd.f32 %v430, %v891
      %v893 = vpop.f32.mrf.mxu0
      %v894 = vadd.f32 %v434, %v893
      %v895 = vpop.f32.mrf.mxu0
      %v896 = vadd.f32 %v430, %v895
      %v897 = vpop.f32.mrf.mxu0
      %v898 = vadd.f32 %v434, %v897
      %899 = vdwg.mxu0
      %v900 = vpack.c.bf16 %v720, %v716
      %v901 = vpack.c.bf16 %v722, %v718
      %v902 = vpack.c.bf16 %v793, %v789
      %v903 = vpack.c.bf16 %v795, %v791
      %v904 = vpack.c.bf16 %v866, %v862
      %v905 = vpack.c.bf16 %v868, %v864
      %v906 = vpack.c.bf16 %v730, %v726
      %v907 = vpack.c.bf16 %v732, %v728
      %v908 = vpack.c.bf16 %v803, %v799
      %v909 = vpack.c.bf16 %v805, %v801
      %v910 = vpack.c.bf16 %v876, %v872
      %v911 = vpack.c.bf16 %v878, %v874
      %v912 = vpack.c.bf16 %v740, %v736
      %v913 = vpack.c.bf16 %v742, %v738
      %v914 = vpack.c.bf16 %v813, %v809
      %v915 = vpack.c.bf16 %v815, %v811
      %v916 = vpack.c.bf16 %v886, %v882
      %v917 = vpack.c.bf16 %v888, %v884
      %v918 = vpack.c.bf16 %v750, %v746
      %v919 = vpack.c.bf16 %v752, %v748
      %v920 = vpack.c.bf16 %v823, %v819
      %v921 = vpack.c.bf16 %v825, %v821
      %v922 = vpack.c.bf16 %v896, %v892
      %v923 = vpack.c.bf16 %v898, %v894
      %v948 = vunpack.c.l.b16 %v900
      %v949 = vunpack.c.l.b16 %v901
      %v950 = vunpack.c.l.b16 %v902
      %v951 = vunpack.c.l.b16 %v903
      %v952 = vunpack.c.l.b16 %v904
      %v953 = vunpack.c.l.b16 %v905
      %v954 = vunpack.c.h.b16 %v900
      %v955 = vunpack.c.h.b16 %v901
      %v956 = vunpack.c.h.b16 %v902
      %v957 = vunpack.c.h.b16 %v903
      %v958 = vunpack.c.h.b16 %v904
      %v959 = vunpack.c.h.b16 %v905
      %v960 = vunpack.c.l.b16 %v906
      %v961 = vunpack.c.l.b16 %v907
      %v962 = vunpack.c.l.b16 %v908
      %v963 = vunpack.c.l.b16 %v909
      %v964 = vunpack.c.l.b16 %v910
      %v965 = vunpack.c.l.b16 %v911
      %v966 = vunpack.c.h.b16 %v906
      %v967 = vunpack.c.h.b16 %v907
      %v968 = vunpack.c.h.b16 %v908
      %v969 = vunpack.c.h.b16 %v909
      %v970 = vunpack.c.h.b16 %v910
      %v971 = vunpack.c.h.b16 %v911
      %v972 = vunpack.c.l.b16 %v912
      %v973 = vunpack.c.l.b16 %v913
      %v974 = vunpack.c.l.b16 %v914
      %v975 = vunpack.c.l.b16 %v915
      %v976 = vunpack.c.l.b16 %v916
      %v977 = vunpack.c.l.b16 %v917
      %v978 = vunpack.c.h.b16 %v912
      %v979 = vunpack.c.h.b16 %v913
      %v980 = vunpack.c.h.b16 %v914
      %v981 = vunpack.c.h.b16 %v915
      %v982 = vunpack.c.h.b16 %v916
      %v983 = vunpack.c.h.b16 %v917
      %v984 = vunpack.c.l.b16 %v918
      %v985 = vunpack.c.l.b16 %v919
      %v986 = vunpack.c.l.b16 %v920
      %v987 = vunpack.c.l.b16 %v921
      %v988 = vunpack.c.l.b16 %v922
      %v989 = vunpack.c.l.b16 %v923
      %v990 = vunpack.c.h.b16 %v918
      %v991 = vunpack.c.h.b16 %v919
      %v992 = vunpack.c.h.b16 %v920
      %v993 = vunpack.c.h.b16 %v921
      %v994 = vunpack.c.h.b16 %v922
      %v995 = vunpack.c.h.b16 %v923
      %v996 = vpack.c.b16 %v949, %v948
      %v997 = vpack.c.b16 %v951, %v950
      %v998 = vpack.c.b16 %v953, %v952
      %v999 = vpack.c.b16 %v955, %v954
      %v1000 = vpack.c.b16 %v957, %v956
      %v1001 = vpack.c.b16 %v959, %v958
      %v1002 = vpack.c.b16 %v961, %v960
      %v1003 = vpack.c.b16 %v963, %v962
      %v1004 = vpack.c.b16 %v965, %v964
      %v1005 = vpack.c.b16 %v967, %v966
      %v1006 = vpack.c.b16 %v969, %v968
      %v1007 = vpack.c.b16 %v971, %v970
      %v1008 = vpack.c.b16 %v973, %v972
      %v1009 = vpack.c.b16 %v975, %v974
      %v1010 = vpack.c.b16 %v977, %v976
      %v1011 = vpack.c.b16 %v979, %v978
      %v1012 = vpack.c.b16 %v981, %v980
      %v1013 = vpack.c.b16 %v983, %v982
      %v1014 = vpack.c.b16 %v985, %v984
      %v1015 = vpack.c.b16 %v987, %v986
      %v1016 = vpack.c.b16 %v989, %v988
      %v1017 = vpack.c.b16 %v991, %v990
      %v1018 = vpack.c.b16 %v993, %v992
      %v1019 = vpack.c.b16 %v995, %v994
      %1044 = vst [vmem:[%s228] sm:$0xff] %v996
      %1045 = vst [vmem:[%s228 + $0x8] sm:$0xff] %v997
      %1046 = vst [vmem:[%s228 + $0x10] sm:$0xff] %v998
      %1047 = vst [vmem:[%s228 + $0x18] sm:$0xff] %v999
      %1048 = vst [vmem:[%s228 + $0x20] sm:$0xff] %v1000
      %1049 = vst [vmem:[%s228 + $0x28] sm:$0xff] %v1001
      %1050 = vst [vmem:[%s228 + $0x30] sm:$0xff] %v1002
      %1051 = vst [vmem:[%s228 + $0x38] sm:$0xff] %v1003
      %1052 = vst [vmem:[%s228 + $0x40] sm:$0xff] %v1004
      %1053 = vst [vmem:[%s228 + $0x48] sm:$0xff] %v1005
      %1054 = vst [vmem:[%s228 + $0x50] sm:$0xff] %v1006
      %1055 = vst [vmem:[%s228 + $0x58] sm:$0xff] %v1007
      %1056 = vst [vmem:[%s228 + $0x60] sm:$0xff] %v1008
      %1057 = vst [vmem:[%s228 + $0x68] sm:$0xff] %v1009
      %1058 = vst [vmem:[%s228 + $0x70] sm:$0xff] %v1010
      %1059 = vst [vmem:[%s228 + $0x78] sm:$0xff] %v1011
      %1060 = vst [vmem:[%s228 + $0x80] sm:$0xff] %v1012
      %1061 = vst [vmem:[%s228 + $0x88] sm:$0xff] %v1013
      %1062 = vst [vmem:[%s228 + $0x90] sm:$0xff] %v1014
      %1063 = vst [vmem:[%s228 + $0x98] sm:$0xff] %v1015
      %1064 = vst [vmem:[%s228 + $0xa0] sm:$0xff] %v1016
      %1065 = vst [vmem:[%s228 + $0xa8] sm:$0xff] %v1017
      %1066 = vst [vmem:[%s228 + $0xb0] sm:$0xff] %v1018
      %1067 = vst [vmem:[%s228 + $0xb8] sm:$0xff] %v1019
      %s1068 = smul.u32 8, %s16
      %p1069 = scmp.lt.s32.totalorder %s1068, 15
      %s1070 = scalar_select %p1069, %s1068, 15
      %s1071 = smul.addr %s1070, 6
      %s1072 = smul.addr %s1071, 4
      %s1073 = scalar_lea.vmem %s5, %s1072
      // Predicated region
      $region41: #{stdn_forward.1} parent=39 // pred_check
        %p1074 = pneg %p144
      $region42: #{stdn_forward.1} parent=39 // pred_check_branch
        %1076 = sbr.rel (%p1074) target = $region44
      $region43: #{stdn_forward.1} parent=39 // pred_region
        %s1077 = smul.u32 8, %s16
      $region44: #{stdn_forward.1} parent=39 // pred_fallthru
        _
    $region40: #{stdn_forward.1} parent=5 // pred_fallthru
      _
    %p1078 = scmp.le.s32.totalorder 2, %s11
    // Predicated region
    $region45: #{stdn_forward.1} parent=5 // pred_check
      %p1079 = pneg %p1078
    $region46: #{stdn_forward.1} parent=5 // pred_check_branch
      %1081 = sbr.rel (%p1079) target = $region48
    $region47: #{stdn_forward.1} parent=5 // pred_region
      %s1082 = ssub.s32 %s11, 2
      // Predicated region
      $region49: #{stdn_forward.1} parent=47 // pred_check
        %p1083 = pneg %p150
      $region50: #{stdn_forward.1} parent=47 // pred_check_branch
        %1085 = sbr.rel (%p1083) target = $region52
      $region51: #{stdn_forward.1} parent=47 // pred_region
        %s1086 = smul.u32 8, %s17
        %p1087 = scmp.lt.s32.totalorder %s1086, 15
        %s1088 = scalar_select %p1087, %s1086, 15
        %s1089 = smul.addr %s1088, 6
        %s1090 = smul.addr %s1089, 4
        %s1091 = scalar_lea.vmem %s5, %s1090
      $region52: #{stdn_forward.1} parent=47 // pred_fallthru
        _
    $region48: #{stdn_forward.1} parent=5 // pred_fallthru
      _
  $region6: #{stdn_forward.1} parent=0 // loop_footer
    %s15 = sadd.s32 1, %s11
  $region7: #{stdn_forward.1} parent=0 // loop_footer_branch
    %10 = sbr.rel target = $region3
  $region8: #{stdn_forward.1} parent=0 // loop_exit
    _

</llo_original>
